<compile_context>
chip_gen: v6e
topology: v6e:2x2x1
jax: 0.10.0
libtpu: 0.0.40
codegen_flags: <defaults>
</compile_context>

<pallas_src>
import functools

import jax
import jax.numpy as jnp
from jax.experimental import pallas as pl
from jax.experimental.pallas import tpu as pltpu


# ----------------------------- fused (plain-jnp) epilogues -------------------

def requ_fused(x):
    """requ(x) = relu(x)**2 — use this inside a producer kernel / let XLA fuse."""
    r = jnp.maximum(x, 0.0)
    return r * r


def requr_fused(x):
    """requr(x) = relu(x)**2 - relu(x-0.5)**2 — fusable epilogue form."""
    r0 = jnp.maximum(x, 0.0)
    r1 = jnp.maximum(x - 0.5, 0.0)
    return (r0 - r1) * (r0 + r1)


# ----------------------------- Pallas kernels --------------------------------

def _requ_kernel(x_ref, o_ref, *, compute_dtype):
    x = x_ref[...].astype(compute_dtype)
    r = jnp.maximum(x, 0.0)
    o_ref[...] = (r * r).astype(o_ref.dtype)


def _requr_kernel(x_ref, o_ref, *, compute_dtype):
    # (r0 - r1) * (r0 + r1) == r0**2 - r1**2, one fewer vmul
    x = x_ref[...].astype(compute_dtype)
    r0 = jnp.maximum(x, 0.0)
    r1 = jnp.maximum(x - 0.5, 0.0)
    o_ref[...] = ((r0 - r1) * (r0 + r1)).astype(o_ref.dtype)


# ----------------------------- layout helpers ---------------------------------

_SINGLE_BLOCK_BYTES = 2 << 20   # whole-array fast path threshold (fits VMEM easily)


def _round_up(n, m):
    return ((n + m - 1) // m) * m


def _sublane_multiple(dtype):
    # f32 -> 8 rows/vreg, bf16 -> 16, int8/fp8 -> 32.
    itemsize = jnp.dtype(dtype).itemsize
    return {4: 8, 2: 16, 1: 32}.get(itemsize, 8)


def _tpu_generation():
    """Best-effort chip generation (5/6/7); 0 if unknown (be conservative)."""
    try:
        kind = jax.devices()[0].device_kind.lower()
        for g in (7, 6, 5, 4):
            if "v%d" % g in kind:
                return g
    except Exception:  # noqa: BLE001 - detection is advisory only
        pass
    return 0


def _target_block_bytes(gen):
    # v6e/v7x: 4 MiB blocks (4 buffers = 16 MiB < 32 MiB scoped VMEM default).
    # v5e / unknown: 2 MiB blocks (8 MiB < v5e's 16 MiB scoped default).
    if gen >= 6:
        return 4 << 20
    return 2 << 20


def _pick_lane(total):
    for cand in (512, 256, 128):
        if total % cand == 0:
            return cand
    return None


# ----------------------------- wrappers ---------------------------------------

def _elementwise_call(kernel_fn, x, flops_per_elem):
    """Run an elementwise kernel over x (streaming, HBM-bandwidth bound)."""
    if x.size == 0:
        return x

    dtype = x.dtype
    itemsize = jnp.dtype(dtype).itemsize
    total = int(x.size)
    total_bytes = total * itemsize

    gen = _tpu_generation()
    # bf16/f16 native on v6e/v7x (bf16 VALU); upcast to f32 on v5-gen / unknown.
    compute_dtype = dtype if (itemsize >= 4 or gen >= 6) else jnp.float32
    kernel = functools.partial(kernel_fn, compute_dtype=compute_dtype)

    # ---- Path 1: small/medium tensor -> single full-array block, no padding ----
    if total_bytes <= _SINGLE_BLOCK_BYTES:
        lane = _pick_lane(total)
        if lane is not None:
            x2d = x.reshape(total // lane, lane)       # lane-dense, free reshape
        elif x.ndim >= 2:
            x2d = x                                    # full-dims block exception
        else:
            x2d = x.reshape(1, -1)
        out = pl.pallas_call(
            kernel,
            out_shape=jax.ShapeDtypeStruct(x2d.shape, dtype),
        )(x2d)
        return out.reshape(x.shape)

    # ---- Path 2/3: large tensor -> lane-dense tiled streaming pipeline ----
    sub = _sublane_multiple(dtype)
    lane = _pick_lane(total)
    padded = False
    if lane is not None:
        rows = total // lane
        x2d = x.reshape(rows, lane)                    # no pad, no output slice
    else:
        # Rare ragged fallback (flat size not a multiple of 128): pad < 512 elems.
        # TODO(synk): could split a <512-element tail to plain jnp to avoid the
        # pad/slice copies, but this branch is uncommon for real activations.
        lane = 512
        rows = pl.cdiv(total, lane)
        flat = jnp.pad(x.reshape(-1), (0, rows * lane - total))
        x2d = flat.reshape(rows, lane)
        padded = True

    block_bytes = _target_block_bytes(gen)
    block_rows = max(sub, (block_bytes // (lane * itemsize)) // sub * sub)
    block_rows = min(block_rows, _round_up(rows, sub))
    # Guarantee >= 2 grid steps so both TensorCores get work on dual-core chips
    # (and the pipeline actually overlaps); halve the block until that holds.
    while block_rows > sub and pl.cdiv(rows, block_rows) < 2:
        block_rows = max(sub, ((block_rows // 2) // sub) * sub)

    grid = (pl.cdiv(rows, block_rows),)                # ragged last block is masked
    out2d = pl.pallas_call(
        kernel,
        out_shape=jax.ShapeDtypeStruct((rows, lane), dtype),
        grid=grid,
        in_specs=[pl.BlockSpec((block_rows, lane), lambda i: (i, 0))],
        out_specs=pl.BlockSpec((block_rows, lane), lambda i: (i, 0)),
        compiler_params=pltpu.CompilerParams(
            dimension_semantics=("parallel",)),
        cost_estimate=pl.CostEstimate(
            flops=flops_per_elem * rows * lane,
            bytes_accessed=2 * rows * lane * itemsize,
            transcendentals=0),
    )(x2d)

    if padded:
        return out2d.reshape(-1)[:total].reshape(x.shape)
    return out2d.reshape(x.shape)


def dynnn_forward(x):
    """DynNN.forward(x) == x.  No kernel: an identity Pallas call would only add
    a full HBM read+write for zero compute, so we return x directly."""
    return x


def requ(x):
    return _elementwise_call(_requ_kernel, x, flops_per_elem=2)


def requr(x):
    return _elementwise_call(_requr_kernel, x, flops_per_elem=6)


# ----------------------------- main -------------------------------------------

if __name__ == "__main__":
    key = jax.random.PRNGKey(0)
    k0, k1 = jax.random.split(key)

    # NCHW input, consistent with the torch module's conv-style conventions.
    x = jax.random.normal(k0, (2, 4, 16, 16), dtype=jnp.float32)

    # Forward (identity) — zero-cost, semantics preserved.
    y = jax.block_until_ready(dynnn_forward(x))
    assert y.shape == x.shape and y.dtype == x.dtype
    assert bool(jnp.allclose(y, x)), "identity forward mismatch"

    # Small-tensor path (single full-array block).
    r1 = jax.block_until_ready(requ(x))
    assert bool(jnp.allclose(r1, requ_fused(x), atol=1e-5, rtol=1e-5)), "requ mismatch"

    r2 = jax.block_until_ready(requr(x))
    assert bool(jnp.allclose(r2, requr_fused(x), atol=1e-5, rtol=1e-5)), "requr mismatch"

    # Larger activation to exercise the tiled streaming path (ragged last block,
    # >= 2 grid steps, no pad/slice since size % 128 == 0).
    xl = jax.random.normal(k1, (8, 96, 32, 32), dtype=jnp.float32)  # 3 MiB
    rl1 = jax.block_until_ready(requ(xl))
    assert bool(jnp.allclose(rl1, requ_fused(xl), atol=1e-5, rtol=1e-5)), "requ (large) mismatch"
    rl2 = jax.block_until_ready(requr(xl))
    assert bool(jnp.allclose(rl2, requr_fused(xl), atol=1e-5, rtol=1e-5)), "requr (large) mismatch"

    print("KERNEL_OK")
</pallas_src>

<mosaic_0001>
module attributes {stable_mosaic.version = 11 : i64} {
  func.func @_requ_kernel(%arg0: memref<4x512xf32, #tpu.memory_space<vmem>>, %arg1: memref<4x512xf32, #tpu.memory_space<vmem>>) attributes {dimension_semantics = [], scalar_prefetch = 0 : i64, scratch_operands = 0 : i64, tpu.core_type = #tpu.core_type<tc>} {
    %c0 = arith.constant 0 : index
    %c0_0 = arith.constant 0 : index
    %0 = vector.load %arg0[%c0, %c0_0] : memref<4x512xf32, #tpu.memory_space<vmem>>, vector<4x512xf32>
    %cst = arith.constant 0.000000e+00 : f32
    %1 = vector.broadcast %cst : f32 to vector<4x512xf32>
    %2 = arith.maximumf %0, %1 : vector<4x512xf32>
    %3 = arith.mulf %2, %2 : vector<4x512xf32>
    %c0_1 = arith.constant 0 : index
    %c0_2 = arith.constant 0 : index
    %4 = vector.load %arg1[%c0_1, %c0_2] : memref<4x512xf32, #tpu.memory_space<vmem>>, vector<4x512xf32>
    tpu.vector_store %arg1[%c0_1, %c0_2], %3 {strides = array<i32>} : memref<4x512xf32, #tpu.memory_space<vmem>>, vector<4x512xf32>,
    return
  }
}

</mosaic_0001>

<llo_original>
// kernel: tpu_custom_call.1
$region0: #{tpu_custom_call.1}
  #allocation0 [shape = 'u32[]', space=smem, size = 0x4, offset = 0x4, fixed_abs, tag = 'smem constant byte address 0x4 - core index']
  #allocation1 [shape = 'u32[144,128]{1,0:T(1,128)}', space=vmem, size = 0x12000, scoped, tag = 'internal scratch']
  %s0 = inlined_call_operand.hbm [shape: f32[4,512], index: 0, kind: input, shape index: {}]
  %s1 = inlined_call_operand.hbm [shape: f32[4,512], index: 1, kind: output, shape index: {}]
  %s2 = sld [smem:[#allocation0]]
  $region18: #{tpu_custom_call.1} parent=0
    _
  %s4 = ssub.s32 1, %s2
  %s5 = scalar_select 0, %s4, %s2
  $region1: #{tpu_custom_call.1} parent=0
    #allocation2 [shape = 'u8[8192]{0}', space=vmem, size = 0x2000, scoped, tag = 'input window, operand 0, single buffered']
    #allocation3 [shape = 's32[1]{0}', space=sflag, size = 0x4, scoped, tag = 'scoped memory for tpu_custom_call.1']
    #allocation4 [shape = 's32[1]{0}', space=sflag, size = 0x4, scoped, tag = 'scoped memory for tpu_custom_call.1']
    #allocation5 [shape = 'u8[8192]{0}', space=vmem, size = 0x2000, scoped, tag = 'output window, operand 0, single buffered']
    %6 = vsyncpa [#allocation3], 0
    %7 = vsyncpa [#allocation4], 0
    // Predicated region
    $region2: #{tpu_custom_call.1} parent=1 // pred_check
      _
    $region3: #{tpu_custom_call.1} parent=1 // pred_check_branch
      %9 = sbr.rel (0) target = $region5
    $region4: #{tpu_custom_call.1} parent=1 // pred_region
      %s11 = ssub.s32 256, 256
      %12 = vsyncadd [#allocation3], %s11
      %s14 = sshll.u32 [#allocation2], 4
      %s15 = int_to_ptr.vmem [resolvable:$true] %s14
      %17 = dma.hbm_to_vmem [thread:$0]  %s0, 256, %s15, [#allocation3]
    $region5: #{tpu_custom_call.1} parent=1 // pred_fallthru
      _
    // Predicated region
    $region6: #{tpu_custom_call.1} parent=1 // pred_check
      _
    $region7: #{tpu_custom_call.1} parent=1 // pred_check_branch
      %19 = sbr.rel (0) target = $region9
    $region8: #{tpu_custom_call.1} parent=1 // pred_region
      %20 = dma.done [#allocation3], 256
    $region9: #{tpu_custom_call.1} parent=1 // pred_fallthru
      _
    %v21 = vld [vmem:[#allocation2] sm:$0xff]
    %v22 = vld [vmem:[#allocation2 + $0x8] sm:$0xff]
    %v23 = vmax.f32 %v21, 0.0
    %v24 = vmax.f32 %v22, 0.0
    %v25 = vmul.f32 %v23, %v23
    %v26 = vmul.f32 %v24, %v24
    %27 = vst [vmem:[#allocation5] sm:$0xff] %v25
    %28 = vst [vmem:[#allocation5 + $0x8] sm:$0xff] %v26
    // Predicated region
    $region10: #{tpu_custom_call.1} parent=1 // pred_check
      _
    $region11: #{tpu_custom_call.1} parent=1 // pred_check_branch
      %30 = sbr.rel (0) target = $region13
    $region12: #{tpu_custom_call.1} parent=1 // pred_region
      %s32 = ssub.s32 256, 256
      %33 = vsyncadd [#allocation4], %s32
      %s35 = sshll.u32 [#allocation5], 4
      %s36 = int_to_ptr.vmem [resolvable:$true] %s35
      %38 = dma.vmem_to_hbm [thread:$0]  %s36, 256, %s1, [#allocation4]
    $region13: #{tpu_custom_call.1} parent=1 // pred_fallthru
      _
    // Predicated region
    $region14: #{tpu_custom_call.1} parent=1 // pred_check
      _
    $region15: #{tpu_custom_call.1} parent=1 // pred_check_branch
      %40 = sbr.rel (0) target = $region17
    $region16: #{tpu_custom_call.1} parent=1 // pred_region
      %41 = dma.done [#allocation4], 256
    $region17: #{tpu_custom_call.1} parent=1 // pred_fallthru
      _
    %42 = vsyncpa [#allocation3], 1
    %43 = vsyncpa [#allocation4], 1

</llo_original>
